<compile_context>
chip_gen: v5e
topology: v5e:2x2
jax: 0.10.0
libtpu: 0.0.40
codegen_flags: <defaults>
</compile_context>

<pallas_src>
import jax
import jax.numpy as jnp
import numpy as np
from jax.experimental import pallas as pl
from jax.experimental.pallas import tpu as pltpu

BN_EPS = 1e-5  # PyTorch BatchNorm2d default eps


def _value_head_kernel(x_ref, wc_ref, w1t_ref, b1_ref, w2_ref, scal_ref, o_ref):
    # x_ref   : [TB, C, HW]      x tile (f32 or bf16), HW lane-dense (VMEM)
    # wc_ref  : [1, C, 1]        f32  BN-folded 1x1 conv weight (VMEM)
    # w1t_ref : [HW, HID_PAD]    f32  fc1 weight^T, zero-padded (VMEM)
    # b1_ref  : [1, HID_PAD]     f32  fc1 bias, zero-padded (VMEM)
    # w2_ref  : [1, HID_PAD]     f32  fc2 weight row, zero-padded (VMEM)
    # scal_ref: [2]              f32  [folded conv/BN bias, fc2 bias] (SMEM)
    # o_ref   : [TB, 1]          f32  (VMEM)
    conv_b = scal_ref[0]
    fc2_b = scal_ref[1]

    # Upcast right after load (free for f32; needed for bf16 on v5e — no bf16
    # VALU there), then 1x1 conv (single out channel) with BN folded in + ReLU.
    x = x_ref[...].astype(jnp.float32)                             # [TB, C, HW]
    y = jnp.sum(x * wc_ref[...], axis=1) + conv_b                  # [TB, HW]
    y = jnp.maximum(y, 0.0)

    # fc1 + ReLU on the MXU (zero-padded HIDDEN keeps h lane-dense).
    h = jnp.dot(y, w1t_ref[...], preferred_element_type=jnp.float32) + b1_ref[...]
    h = jnp.maximum(h, 0.0)                                        # [TB, HID_PAD]

    # fc2 (out features = 1): VPU multiply + lane reduce, no extra MXU pass.
    out = jnp.sum(h * w2_ref[...], axis=-1, keepdims=True) + fc2_b  # [TB, 1]
    o_ref[...] = out.astype(o_ref.dtype)


def _round_up(v, m):
    return ((v + m - 1) // m) * m


def _pow2_floor(v):
    """Largest power of two <= v (v >= 1)."""
    p = 1
    while p * 2 <= v:
        p *= 2
    return p


def value_head(x_nchw, params):
    """x_nchw: [B, C, 19, 19], float32 or bfloat16 (PyTorch NCHW convention)."""
    B, C, H, W = x_nchw.shape
    HW = H * W

    # Lane-dense layout: [B, C, HW] is just a reshape of NCHW (no transpose).
    # Keep the native dtype (bf16 streams at half the HBM bytes); only cast if
    # it is something the kernel can't consume directly.
    if x_nchw.dtype not in (jnp.float32, jnp.bfloat16):
        x_nchw = x_nchw.astype(jnp.float32)
    x = x_nchw.reshape(B, C, HW)

    # --- Fold eval-mode BatchNorm2d(1) + conv bias into the conv weight/bias.
    gamma = params["bn_gamma"][0].astype(jnp.float32)
    beta = params["bn_beta"][0].astype(jnp.float32)
    mean = params["bn_mean"][0].astype(jnp.float32)
    var = params["bn_var"][0].astype(jnp.float32)
    inv = gamma * jax.lax.rsqrt(var + BN_EPS)
    wc = (params["conv_w"].reshape(C).astype(jnp.float32) * inv).reshape(1, C, 1)
    conv_b = (params["conv_b"][0].astype(jnp.float32) - mean) * inv + beta

    # --- fc1 / fc2 weights, HIDDEN zero-padded to a multiple of 128 lanes.
    hidden = params["fc1_w"].shape[0]
    HID_PAD = max(128, _round_up(hidden, 128))
    w1t = jnp.zeros((HW, HID_PAD), jnp.float32)
    w1t = w1t.at[:, :hidden].set(params["fc1_w"].T.astype(jnp.float32))
    b1 = jnp.zeros((1, HID_PAD), jnp.float32)
    b1 = b1.at[0, :hidden].set(params["fc1_b"].astype(jnp.float32))
    w2 = jnp.zeros((1, HID_PAD), jnp.float32)
    w2 = w2.at[0, :hidden].set(params["fc2_w"].reshape(-1).astype(jnp.float32))

    scal = jnp.stack([conv_b, params["fc2_b"][0].astype(jnp.float32)])

    # --- Batch tiling.
    #  * VMEM budget: ~12 MiB per x block (HW pads to 384 lanes in VMEM), so
    #    double-buffered x (~25 MiB) + weights stays inside the 32 MiB scoped
    #    VMEM limit on every generation (incl. v7x's 64 MiB physical VMEM).
    #  * TB is a power of two (8..256) — no odd divisors, minimal batch pad.
    #  * When B is large enough, cap TB so the grid has >= 4 steps: feeds both
    #    v7x TensorCores ("parallel" axis) and keeps the pipeline busy.
    bytes_per_el = jnp.dtype(x.dtype).itemsize
    hw_lanes = _round_up(HW, 128)
    row_vmem_bytes = C * hw_lanes * bytes_per_el
    tb_vmem_cap = max(8, min(256, (12 * 1024 * 1024) // row_vmem_bytes))
    tb_multi_step = max(8, B // 4)            # aim for >= 4 grid steps
    TB = _pow2_floor(min(tb_vmem_cap, tb_multi_step))

    B_pad = _round_up(max(B, TB), TB)
    if B_pad != B:
        x = jnp.pad(x, ((0, B_pad - B), (0, 0), (0, 0)))

    out = pl.pallas_call(
        _value_head_kernel,
        out_shape=jax.ShapeDtypeStruct((B_pad, 1), jnp.float32),
        grid=(B_pad // TB,),
        in_specs=[
            pl.BlockSpec((TB, C, HW), lambda i: (i, 0, 0)),      # x (streamed)
            # Constant index maps -> block never changes -> fetched once,
            # stays resident across grid steps (no per-step re-DMA).
            pl.BlockSpec((1, C, 1), lambda i: (0, 0, 0)),        # folded conv w
            pl.BlockSpec((HW, HID_PAD), lambda i: (0, 0)),       # fc1 weight^T
            pl.BlockSpec((1, HID_PAD), lambda i: (0, 0)),        # fc1 bias
            pl.BlockSpec((1, HID_PAD), lambda i: (0, 0)),        # fc2 weight row
            pl.BlockSpec(memory_space=pltpu.MemorySpace.SMEM),   # packed scalars
        ],
        out_specs=pl.BlockSpec((TB, 1), lambda i: (i, 0)),
        compiler_params=pltpu.CompilerParams(
            dimension_semantics=("parallel",),
            vmem_limit_bytes=32 * 1024 * 1024,
        ),
    )(x, wc, w1t, b1, w2, scal)
    return out[:B]


def value_head_reference(x_nchw, params):
    """Pure-JAX reference mirroring the PyTorch forward (eval-mode BN)."""
    B = x_nchw.shape[0]
    xf = x_nchw.astype(jnp.float32)
    y = jnp.einsum("bchw,c->bhw", xf, params["conv_w"].reshape(-1)) + params["conv_b"][0]
    inv = 1.0 / jnp.sqrt(params["bn_var"][0] + BN_EPS)
    y = (y - params["bn_mean"][0]) * params["bn_gamma"][0] * inv + params["bn_beta"][0]
    y = jnp.maximum(y, 0.0)
    y = y.reshape(B, -1)                                   # [B, 361]
    h = jnp.maximum(y @ params["fc1_w"].T + params["fc1_b"], 0.0)
    return h @ params["fc2_w"].T + params["fc2_b"]


if __name__ == "__main__":
    # Spatial size must be 19x19 (fc1 is hardcoded to 19*19*1 inputs).
    B, FILTERS, H, W, HIDDEN = 2, 32, 19, 19, 32

    key = jax.random.PRNGKey(0)
    ks = jax.random.split(key, 10)
    x = jax.random.normal(ks[0], (B, FILTERS, H, W), jnp.float32)

    params = {
        "conv_w": jax.random.normal(ks[1], (1, FILTERS, 1, 1), jnp.float32) * 0.1,
        "conv_b": jax.random.normal(ks[2], (1,), jnp.float32) * 0.1,
        "bn_gamma": jnp.ones((1,), jnp.float32),
        "bn_beta": jnp.zeros((1,), jnp.float32),
        "bn_mean": jax.random.normal(ks[3], (1,), jnp.float32) * 0.1,
        "bn_var": jnp.abs(jax.random.normal(ks[4], (1,), jnp.float32)) + 0.5,
        "fc1_w": jax.random.normal(ks[5], (HIDDEN, H * W), jnp.float32) * 0.05,
        "fc1_b": jax.random.normal(ks[6], (HIDDEN,), jnp.float32) * 0.1,
        "fc2_w": jax.random.normal(ks[7], (1, HIDDEN), jnp.float32) * 0.1,
        "fc2_b": jax.random.normal(ks[8], (1,), jnp.float32) * 0.1,
    }

    out = value_head(x, params)
    jax.block_until_ready(out)

    ref = value_head_reference(x, params)
    assert out.shape == (B, 1)
    np.testing.assert_allclose(np.asarray(out), np.asarray(ref), rtol=2e-3, atol=2e-3)
    print("KERNEL_OK")
</pallas_src>

<mosaic_0001>
module attributes {stable_mosaic.version = 11 : i64} {
  func.func @_value_head_kernel(%arg0: i32, %arg1: memref<8x32x361xf32, #tpu.memory_space<vmem>>, %arg2: memref<1x32x1xf32, #tpu.memory_space<vmem>>, %arg3: memref<361x128xf32, #tpu.memory_space<vmem>>, %arg4: memref<1x128xf32, #tpu.memory_space<vmem>>, %arg5: memref<1x128xf32, #tpu.memory_space<vmem>>, %arg6: memref<2xf32, #tpu.memory_space<smem>>, %arg7: memref<8x1xf32, #tpu.memory_space<vmem>>) attributes {dimension_semantics = [#tpu.dimension_semantics<parallel>], iteration_bounds = array<i64: 1>, scalar_prefetch = 0 : i64, scratch_operands = 0 : i64, tpu.core_type = #tpu.core_type<tc>, window_params = [{transform_indices = @transform_0, window_bounds = array<i64: 8, 32, 361>}, {pipeline_mode = #tpu.pipeline_mode<synchronous>, transform_indices = @transform_1, window_bounds = array<i64: 1, 32, 1>}, {pipeline_mode = #tpu.pipeline_mode<synchronous>, transform_indices = @transform_2, window_bounds = array<i64: 361, 128>}, {pipeline_mode = #tpu.pipeline_mode<synchronous>, transform_indices = @transform_3, window_bounds = array<i64: 1, 128>}, {pipeline_mode = #tpu.pipeline_mode<synchronous>, transform_indices = @transform_4, window_bounds = array<i64: 1, 128>}, {transform_indices = @transform_5, window_bounds = array<i64: 2>}, {transform_indices = @transform_6, window_bounds = array<i64: 8, 1>}]} {
    %c0 = arith.constant 0 : index
    %0 = memref.load %arg6[%c0] : memref<2xf32, #tpu.memory_space<smem>>
    %c1 = arith.constant 1 : index
    %1 = memref.load %arg6[%c1] : memref<2xf32, #tpu.memory_space<smem>>
    %c0_0 = arith.constant 0 : index
    %c0_1 = arith.constant 0 : index
    %c0_2 = arith.constant 0 : index
    %2 = vector.load %arg1[%c0_0, %c0_1, %c0_2] : memref<8x32x361xf32, #tpu.memory_space<vmem>>, vector<8x32x361xf32>
    %c0_3 = arith.constant 0 : index
    %c0_4 = arith.constant 0 : index
    %c0_5 = arith.constant 0 : index
    %3 = vector.load %arg2[%c0_3, %c0_4, %c0_5] : memref<1x32x1xf32, #tpu.memory_space<vmem>>, vector<1x32x1xf32>
    %4 = vector.broadcast %3 : vector<1x32x1xf32> to vector<8x32x361xf32>
    %5 = arith.mulf %2, %4 : vector<8x32x361xf32>
    %cst = arith.constant dense<0.000000e+00> : vector<8x361xf32>
    %6 = vector.multi_reduction <add>, %5, %cst [1] : vector<8x32x361xf32> to vector<8x361xf32>
    %7 = vector.broadcast %0 : f32 to vector<8x361xf32>
    %8 = arith.addf %6, %7 : vector<8x361xf32>
    %cst_6 = arith.constant 0.000000e+00 : f32
    %9 = vector.broadcast %cst_6 : f32 to vector<8x361xf32>
    %10 = arith.maximumf %8, %9 : vector<8x361xf32>
    %c0_7 = arith.constant 0 : index
    %c0_8 = arith.constant 0 : index
    %11 = vector.load %arg3[%c0_7, %c0_8] : memref<361x128xf32, #tpu.memory_space<vmem>>, vector<361x128xf32>
    %cst_9 = arith.constant dense<0.000000e+00> : vector<8x128xf32>
    %12 = tpu.matmul %10, %11, %cst_9 {dimension_numbers = #tpu.dot_dimension_numbers<[1], [0], [0], [1], [0, 0, 1, 1], [], []>} : vector<8x361xf32>, vector<361x128xf32>, vector<8x128xf32> -> vector<8x128xf32>
    %c0_10 = arith.constant 0 : index
    %c0_11 = arith.constant 0 : index
    %13 = vector.load %arg4[%c0_10, %c0_11] : memref<1x128xf32, #tpu.memory_space<vmem>>, vector<1x128xf32>
    %14 = vector.broadcast %13 : vector<1x128xf32> to vector<8x128xf32>
    %15 = arith.addf %12, %14 : vector<8x128xf32>
    %cst_12 = arith.constant 0.000000e+00 : f32
    %16 = vector.broadcast %cst_12 : f32 to vector<8x128xf32>
    %17 = arith.maximumf %15, %16 : vector<8x128xf32>
    %c0_13 = arith.constant 0 : index
    %c0_14 = arith.constant 0 : index
    %18 = vector.load %arg5[%c0_13, %c0_14] : memref<1x128xf32, #tpu.memory_space<vmem>>, vector<1x128xf32>
    %19 = vector.broadcast %18 : vector<1x128xf32> to vector<8x128xf32>
    %20 = arith.mulf %17, %19 : vector<8x128xf32>
    %cst_15 = arith.constant dense<0.000000e+00> : vector<8xf32>
    %21 = vector.multi_reduction <add>, %20, %cst_15 [1] : vector<8x128xf32> to vector<8xf32>
    %22 = vector.shape_cast %21 : vector<8xf32> to vector<8x1xf32>
    %23 = vector.broadcast %1 : f32 to vector<8x1xf32>
    %24 = arith.addf %22, %23 : vector<8x1xf32>
    %c0_16 = arith.constant 0 : index
    %c0_17 = arith.constant 0 : index
    %25 = vector.load %arg7[%c0_16, %c0_17] : memref<8x1xf32, #tpu.memory_space<vmem>>, vector<8x1xf32>
    tpu.vector_store %arg7[%c0_16, %c0_17], %24 {strides = array<i32>} : memref<8x1xf32, #tpu.memory_space<vmem>>, vector<8x1xf32>,
    return
  }
  func.func @transform_0(%arg0: i32) -> (i32, i32, i32) {
    %c0_i32 = arith.constant 0 : i32
    %c0_i32_0 = arith.constant 0 : i32
    %c0_i32_1 = arith.constant 0 : i32
    return %arg0, %c0_i32, %c0_i32_0 : i32, i32, i32
  }
  func.func @transform_1(%arg0: i32) -> (i32, i32, i32) {
    %c0_i32 = arith.constant 0 : i32
    %c0_i32_0 = arith.constant 0 : i32
    %c0_i32_1 = arith.constant 0 : i32
    %c0_i32_2 = arith.constant 0 : i32
    return %c0_i32, %c0_i32_0, %c0_i32_1 : i32, i32, i32
  }
  func.func @transform_2(%arg0: i32) -> (i32, i32) {
    %c0_i32 = arith.constant 0 : i32
    %c0_i32_0 = arith.constant 0 : i32
    %c0_i32_1 = arith.constant 0 : i32
    return %c0_i32, %c0_i32_0 : i32, i32
  }
  func.func @transform_3(%arg0: i32) -> (i32, i32) {
    %c0_i32 = arith.constant 0 : i32
    %c0_i32_0 = arith.constant 0 : i32
    %c0_i32_1 = arith.constant 0 : i32
    return %c0_i32, %c0_i32_0 : i32, i32
  }
  func.func @transform_4(%arg0: i32) -> (i32, i32) {
    %c0_i32 = arith.constant 0 : i32
    %c0_i32_0 = arith.constant 0 : i32
    %c0_i32_1 = arith.constant 0 : i32
    return %c0_i32, %c0_i32_0 : i32, i32
  }
  func.func @transform_5(%arg0: i32) -> i32 {
    %c0_i32 = arith.constant 0 : i32
    %c0_i32_0 = arith.constant 0 : i32
    return %c0_i32 : i32
  }
  func.func @transform_6(%arg0: i32) -> (i32, i32) {
    %c0_i32 = arith.constant 0 : i32
    %c0_i32_0 = arith.constant 0 : i32
    return %arg0, %c0_i32 : i32, i32
  }
}

</mosaic_0001>

<llo_original>
// kernel: tpu_custom_call.1
$region0: #{tpu_custom_call.1}
  #allocation0 [shape = 'u32[]', space=smem, size = 0x4, offset = 0x4, fixed_abs, tag = 'smem constant byte address 0x4 - core index']
  #allocation1 [shape = 'u32[72,128]{1,0:T(1,128)}', space=vmem, size = 0x9000, scoped, tag = 'internal scratch']
  %s0 = inlined_call_operand.hbm [shape: f32[8,32,361], index: 0, kind: input, shape index: {}]
  %s1 = inlined_call_operand.vmem [shape: f32[1,32,1], index: 1, kind: input, shape index: {}]
  %s2 = inlined_call_operand.hbm [shape: f32[361,128], index: 2, kind: input, shape index: {}]
  %s3 = inlined_call_operand.vmem [shape: f32[1,128], index: 3, kind: input, shape index: {}]
  %s4 = inlined_call_operand.vmem [shape: f32[1,128], index: 4, kind: input, shape index: {}]
  %s5 = inlined_call_operand.vmem [shape: f32[2], index: 5, kind: input, shape index: {}]
  %s6 = inlined_call_operand.vmem [shape: f32[8,1], index: 6, kind: output, shape index: {}]
  %s7 = sld [smem:[#allocation0]]
  $region46: #{tpu_custom_call.1} parent=0
    _
  %s9 = ssub.s32 1, %s7
  %s10 = scalar_select 0, %s9, %s7
  $region1: #{tpu_custom_call.1} parent=0
    #allocation2 [shape = 'u8[393216]{0}', space=vmem, size = 0x60000, scoped, tag = 'input window, operand 0, single buffered']
    #allocation3 [shape = 's32[1]{0}', space=sflag, size = 0x4, scoped, tag = 'scoped memory for tpu_custom_call.1']
    #allocation4 [shape = 's32[1]{0}', space=sflag, size = 0x4, scoped, tag = 'scoped memory for tpu_custom_call.1']
    #allocation5 [shape = 'u8[188416]{0}', space=vmem, size = 0x2e000, scoped, tag = 'input window, operand 2, single buffered']
    #allocation6 [shape = 's32[1]{0}', space=sflag, size = 0x4, scoped, tag = 'scoped memory for tpu_custom_call.1']
    #allocation7 [shape = 'u8[512]{0}', space=smem, size = 0x200, scoped, tag = 'input window, operand 5, single buffered']
    %11 = vsyncpa [#allocation3], 0
    %12 = vsyncpa [#allocation6], 0
    %13 = vsyncpa [#allocation4], 0
    // Predicated region
    $region2: #{tpu_custom_call.1} parent=1 // pred_check
      _
    $region3: #{tpu_custom_call.1} parent=1 // pred_check_branch
      %15 = sbr.rel (0) target = $region5
    $region4: #{tpu_custom_call.1} parent=1 // pred_region
      %17 = vsyncadd [#allocation3], 0
      %s18 = sshll.u32 %s0, 4
      %s19 = int_to_ptr.hbm [resolvable:$true] %s18
      %s20 = sshll.u32 [#allocation2], 4
      %s21 = int_to_ptr.vmem [resolvable:$true] %s20
      %26 = dma.hbm_to_vmem [thread:$0]  %s19, 12288, %s21, [#allocation3], 384, 384, 24
    $region5: #{tpu_custom_call.1} parent=1 // pred_fallthru
      _
    // Predicated region
    $region6: #{tpu_custom_call.1} parent=1 // pred_check
      _
    $region7: #{tpu_custom_call.1} parent=1 // pred_check_branch
      %28 = sbr.rel (0) target = $region9
    $region8: #{tpu_custom_call.1} parent=1 // pred_region
      _
    $region9: #{tpu_custom_call.1} parent=1 // pred_fallthru
      _
    // Predicated region
    $region10: #{tpu_custom_call.1} parent=1 // pred_check
      _
    $region11: #{tpu_custom_call.1} parent=1 // pred_check_branch
      %30 = sbr.rel (0) target = $region13
    $region12: #{tpu_custom_call.1} parent=1 // pred_region
      %32 = vsyncadd [#allocation6], 0
      %s33 = sshll.u32 %s2, 4
      %s34 = int_to_ptr.hbm [resolvable:$true] %s33
      %s35 = sshll.u32 [#allocation5], 4
      %s36 = int_to_ptr.vmem [resolvable:$true] %s35
      %41 = dma.hbm_to_vmem [thread:$0]  %s34, 5888, %s36, [#allocation6], 128, 128, 8
    $region13: #{tpu_custom_call.1} parent=1 // pred_fallthru
      _
    // Predicated region
    $region14: #{tpu_custom_call.1} parent=1 // pred_check
      _
    $region15: #{tpu_custom_call.1} parent=1 // pred_check_branch
      %43 = sbr.rel (0) target = $region17
    $region16: #{tpu_custom_call.1} parent=1 // pred_region
      _
    $region17: #{tpu_custom_call.1} parent=1 // pred_fallthru
      _
    // Predicated region
    $region18: #{tpu_custom_call.1} parent=1 // pred_check
      _
    $region19: #{tpu_custom_call.1} parent=1 // pred_check_branch
      %45 = sbr.rel (0) target = $region21
    $region20: #{tpu_custom_call.1} parent=1 // pred_region
      _
    $region21: #{tpu_custom_call.1} parent=1 // pred_fallthru
      _
    // Predicated region
    $region22: #{tpu_custom_call.1} parent=1 // pred_check
      _
    $region23: #{tpu_custom_call.1} parent=1 // pred_check_branch
      %47 = sbr.rel (0) target = $region25
    $region24: #{tpu_custom_call.1} parent=1 // pred_region
      %49 = vsyncadd [#allocation4], 0
      %s51 = sshll.u32 %s5, 4
      %s52 = int_to_ptr.vmem [resolvable:$true] %s51
      %54 = dma.vmem_to_smem %s52, 16, [#allocation7], [#allocation4]
    $region25: #{tpu_custom_call.1} parent=1 // pred_fallthru
      _
    // Predicated region
    $region26: #{tpu_custom_call.1} parent=1 // pred_check
      _
    $region27: #{tpu_custom_call.1} parent=1 // pred_check_branch
      %56 = sbr.rel (0) target = $region29
    $region28: #{tpu_custom_call.1} parent=1 // pred_region
      %58 = dma.done [#allocation3], 12288
    $region29: #{tpu_custom_call.1} parent=1 // pred_fallthru
      _
    // Predicated region
    $region30: #{tpu_custom_call.1} parent=1 // pred_check
      _
    $region31: #{tpu_custom_call.1} parent=1 // pred_check_branch
      %60 = sbr.rel (0) target = $region33
    $region32: #{tpu_custom_call.1} parent=1 // pred_region
      %62 = dma.done [#allocation6], 5888
    $region33: #{tpu_custom_call.1} parent=1 // pred_fallthru
      _
    // Predicated region
    $region34: #{tpu_custom_call.1} parent=1 // pred_check
      _
    $region35: #{tpu_custom_call.1} parent=1 // pred_check_branch
      %64 = sbr.rel (0) target = $region37
    $region36: #{tpu_custom_call.1} parent=1 // pred_region
      %66 = dma.done [#allocation4], 16
    $region37: #{tpu_custom_call.1} parent=1 // pred_fallthru
      _
    %67 = sfence
    %s68 = sld [smem:[#allocation7]]
    %s69 = sld [smem:[#allocation7 + $0x1]]
    %v70 = vld [vmem:[#allocation2] sm:$0xff]
    %v71 = vld [vmem:[#allocation2 + $0x8] sm:$0xff]
    %v72 = vld [vmem:[#allocation2 + $0x10] sm:$0xff]
    %v73 = vld [vmem:[#allocation2 + $0x18] sm:$0xff]
    %v74 = vld [vmem:[#allocation2 + $0x20] sm:$0xff]
    %v75 = vld [vmem:[#allocation2 + $0x28] sm:$0xff]
    %v76 = vld [vmem:[#allocation2 + $0x30] sm:$0xff]
    %v77 = vld [vmem:[#allocation2 + $0x38] sm:$0xff]
    %v78 = vld [vmem:[#allocation2 + $0x40] sm:$0xff]
    %v79 = vld [vmem:[#allocation2 + $0x48] sm:$0xff]
    %v80 = vld [vmem:[#allocation2 + $0x50] sm:$0xff]
    %v81 = vld [vmem:[#allocation2 + $0x58] sm:$0xff]
    %v82 = vld [vmem:[#allocation2 + $0x60] sm:$0xff]
    %v83 = vld [vmem:[#allocation2 + $0x68] sm:$0xff]
    %v84 = vld [vmem:[#allocation2 + $0x70] sm:$0xff]
    %v85 = vld [vmem:[#allocation2 + $0x78] sm:$0xff]
    %v86 = vld [vmem:[#allocation2 + $0x80] sm:$0xff]
    %v87 = vld [vmem:[#allocation2 + $0x88] sm:$0xff]
    %v88 = vld [vmem:[#allocation2 + $0x90] sm:$0xff]
    %v89 = vld [vmem:[#allocation2 + $0x98] sm:$0xff]
    %v90 = vld [vmem:[#allocation2 + $0xa0] sm:$0xff]
    %v91 = vld [vmem:[#allocation2 + $0xa8] sm:$0xff]
    %v92 = vld [vmem:[#allocation2 + $0xb0] sm:$0xff]
    %v93 = vld [vmem:[#allocation2 + $0xb8] sm:$0xff]
    %v94 = vld [vmem:[#allocation2 + $0xc0] sm:$0xff]
    %v95 = vld [vmem:[#allocation2 + $0xc8] sm:$0xff]
    %v96 = vld [vmem:[#allocation2 + $0xd0] sm:$0xff]
    %v97 = vld [vmem:[#allocation2 + $0xd8] sm:$0xff]
    %v98 = vld [vmem:[#allocation2 + $0xe0] sm:$0xff]
    %v99 = vld [vmem:[#allocation2 + $0xe8] sm:$0xff]
    %v100 = vld [vmem:[#allocation2 + $0xf0] sm:$0xff]
    %v101 = vld [vmem:[#allocation2 + $0xf8] sm:$0xff]
    %v102 = vld [vmem:[#allocation2 + $0x100] sm:$0xff]
    %v103 = vld [vmem:[#allocation2 + $0x108] sm:$0xff]
    %v104 = vld [vmem:[#allocation2 + $0x110] sm:$0xff]
    %v105 = vld [vmem:[#allocation2 + $0x118] sm:$0xff]
    %v106 = vld [vmem:[#allocation2 + $0x120] sm:$0xff]
    %v107 = vld [vmem:[#allocation2 + $0x128] sm:$0xff]
    %v108 = vld [vmem:[#allocation2 + $0x130] sm:$0xff]
    %v109 = vld [vmem:[#allocation2 + $0x138] sm:$0xff]
    %v110 = vld [vmem:[#allocation2 + $0x140] sm:$0xff]
    %v111 = vld [vmem:[#allocation2 + $0x148] sm:$0xff]
    %v112 = vld [vmem:[#allocation2 + $0x150] sm:$0xff]
    %v113 = vld [vmem:[#allocation2 + $0x158] sm:$0xff]
    %v114 = vld [vmem:[#allocation2 + $0x160] sm:$0xff]
    %v115 = vld [vmem:[#allocation2 + $0x168] sm:$0xff]
    %v116 = vld [vmem:[#allocation2 + $0x170] sm:$0xff]
    %v117 = vld [vmem:[#allocation2 + $0x178] sm:$0xff]
    %v118 = vld [vmem:[#allocation2 + $0x180] sm:$0xff]
    %v119 = vld [vmem:[#allocation2 + $0x188] sm:$0xff]
    %v120 = vld [vmem:[#allocation2 + $0x190] sm:$0xff]
    %v121 = vld [vmem:[#allocation2 + $0x198] sm:$0xff]
    %v122 = vld [vmem:[#allocation2 + $0x1a0] sm:$0xff]
    %v123 = vld [vmem:[#allocation2 + $0x1a8] sm:$0xff]
    %v124 = vld [vmem:[#allocation2 + $0x1b0] sm:$0xff]
    %v125 = vld [vmem:[#allocation2 + $0x1b8] sm:$0xff]
    %v126 = vld [vmem:[#allocation2 + $0x1c0] sm:$0xff]
    %v127 = vld [vmem:[#allocation2 + $0x1c8] sm:$0xff]
    %v128 = vld [vmem:[#allocation2 + $0x1d0] sm:$0xff]
    %v129 = vld [vmem:[#allocation2 + $0x1d8] sm:$0xff]
    %v130 = vld [vmem:[#allocation2 + $0x1e0] sm:$0xff]
    %v131 = vld [vmem:[#allocation2 + $0x1e8] sm:$0xff]
    %v132 = vld [vmem:[#allocation2 + $0x1f0] sm:$0xff]
    %v133 = vld [vmem:[#allocation2 + $0x1f8] sm:$0xff]
    %v134 = vld [vmem:[#allocation2 + $0x200] sm:$0xff]
    %v135 = vld [vmem:[#allocation2 + $0x208] sm:$0xff]
    %v136 = vld [vmem:[#allocation2 + $0x210] sm:$0xff]
    %v137 = vld [vmem:[#allocation2 + $0x218] sm:$0xff]
    %v138 = vld [vmem:[#allocation2 + $0x220] sm:$0xff]
    %v139 = vld [vmem:[#allocation2 + $0x228] sm:$0xff]
    %v140 = vld [vmem:[#allocation2 + $0x230] sm:$0xff]
    %v141 = vld [vmem:[#allocation2 + $0x238] sm:$0xff]
    %v142 = vld [vmem:[#allocation2 + $0x240] sm:$0xff]
    %v143 = vld [vmem:[#allocation2 + $0x248] sm:$0xff]
    %v144 = vld [vmem:[#allocation2 + $0x250] sm:$0xff]
    %v145 = vld [vmem:[#allocation2 + $0x258] sm:$0xff]
    %v146 = vld [vmem:[#allocation2 + $0x260] sm:$0xff]
    %v147 = vld [vmem:[#allocation2 + $0x268] sm:$0xff]
    %v148 = vld [vmem:[#allocation2 + $0x270] sm:$0xff]
    %v149 = vld [vmem:[#allocation2 + $0x278] sm:$0xff]
    %v150 = vld [vmem:[#allocation2 + $0x280] sm:$0xff]
    %v151 = vld [vmem:[#allocation2 + $0x288] sm:$0xff]
    %v152 = vld [vmem:[#allocation2 + $0x290] sm:$0xff]
    %v153 = vld [vmem:[#allocation2 + $0x298] sm:$0xff]
    %v154 = vld [vmem:[#allocation2 + $0x2a0] sm:$0xff]
    %v155 = vld [vmem:[#allocation2 + $0x2a8] sm:$0xff]
    %v156 = vld [vmem:[#allocation2 + $0x2b0] sm:$0xff]
    %v157 = vld [vmem:[#allocation2 + $0x2b8] sm:$0xff]
    %v158 = vld [vmem:[#allocation2 + $0x2c0] sm:$0xff]
    %v159 = vld [vmem:[#allocation2 + $0x2c8] sm:$0xff]
    %v160 = vld [vmem:[#allocation2 + $0x2d0] sm:$0xff]
    %v161 = vld [vmem:[#allocation2 + $0x2d8] sm:$0xff]
    %v162 = vld [vmem:[#allocation2 + $0x2e0] sm:$0xff]
    %v163 = vld [vmem:[#allocation2 + $0x2e8] sm:$0xff]
    %v164 = vld [vmem:[#allocation2 + $0x2f0] sm:$0xff]
    %v165 = vld [vmem:[#allocation2 + $0x2f8] sm:$0xff]
    %v166 = vld [vmem:[%s1] sm:$0xff]
    %v167 = vld [vmem:[%s1 + $0x8] sm:$0xff]
    %v168 = vld [vmem:[%s1 + $0x10] sm:$0xff]
    %v169 = vld [vmem:[%s1 + $0x18] sm:$0xff]
    %171 = vset.pattern.permute.xlu0 0
    %172 = vperm.xlu0 %171, %v166
    %v173 = vpop.permute.xlu0 %172
    %176 = vset.pattern.permute.xlu0 0
    %177 = vperm.xlu0 %176, %v167
    %v178 = vpop.permute.xlu0 %177
    %181 = vset.pattern.permute.xlu0 0
    %182 = vperm.xlu0 %181, %v168
    %v183 = vpop.permute.xlu0 %182
    %186 = vset.pattern.permute.xlu0 0
    %187 = vperm.xlu0 %186, %v169
    %v188 = vpop.permute.xlu0 %187
    %v190 = vmul.f32 %v70, %v173
    %v191 = vmul.f32 %v71, %v173
    %v192 = vmul.f32 %v72, %v173
    %v193 = vmul.f32 %v73, %v178
    %v194 = vmul.f32 %v74, %v178
    %v195 = vmul.f32 %v75, %v178
    %v196 = vmul.f32 %v76, %v183
    %v197 = vmul.f32 %v77, %v183
    %v198 = vmul.f32 %v78, %v183
    %v199 = vmul.f32 %v79, %v188
    %v200 = vmul.f32 %v80, %v188
    %v201 = vmul.f32 %v81, %v188
    %v202 = vmul.f32 %v82, %v173
    %v203 = vmul.f32 %v83, %v173
    %v204 = vmul.f32 %v84, %v173
    %v205 = vmul.f32 %v85, %v178
    %v206 = vmul.f32 %v86, %v178
    %v207 = vmul.f32 %v87, %v178
    %v208 = vmul.f32 %v88, %v183
    %v209 = vmul.f32 %v89, %v183
    %v210 = vmul.f32 %v90, %v183
    %v211 = vmul.f32 %v91, %v188
    %v212 = vmul.f32 %v92, %v188
    %v213 = vmul.f32 %v93, %v188
    %v214 = vmul.f32 %v94, %v173
    %v215 = vmul.f32 %v95, %v173
    %v216 = vmul.f32 %v96, %v173
    %v217 = vmul.f32 %v97, %v178
    %v218 = vmul.f32 %v98, %v178
    %v219 = vmul.f32 %v99, %v178
    %v220 = vmul.f32 %v100, %v183
    %v221 = vmul.f32 %v101, %v183
    %v222 = vmul.f32 %v102, %v183
    %v223 = vmul.f32 %v103, %v188
    %v224 = vmul.f32 %v104, %v188
    %v225 = vmul.f32 %v105, %v188
    %v226 = vmul.f32 %v106, %v173
    %v227 = vmul.f32 %v107, %v173
    %v228 = vmul.f32 %v108, %v173
    %v229 = vmul.f32 %v109, %v178
    %v230 = vmul.f32 %v110, %v178
    %v231 = vmul.f32 %v111, %v178
    %v232 = vmul.f32 %v112, %v183
    %v233 = vmul.f32 %v113, %v183
    %v234 = vmul.f32 %v114, %v183
    %v235 = vmul.f32 %v115, %v188
    %v236 = vmul.f32 %v116, %v188
    %v237 = vmul.f32 %v117, %v188
    %v238 = vmul.f32 %v118, %v173
    %v239 = vmul.f32 %v119, %v173
    %v240 = vmul.f32 %v120, %v173
    %v241 = vmul.f32 %v121, %v178
    %v242 = vmul.f32 %v122, %v178
    %v243 = vmul.f32 %v123, %v178
    %v244 = vmul.f32 %v124, %v183
    %v245 = vmul.f32 %v125, %v183
    %v246 = vmul.f32 %v126, %v183
    %v247 = vmul.f32 %v127, %v188
    %v248 = vmul.f32 %v128, %v188
    %v249 = vmul.f32 %v129, %v188
    %v250 = vmul.f32 %v130, %v173
    %v251 = vmul.f32 %v131, %v173
    %v252 = vmul.f32 %v132, %v173
    %v253 = vmul.f32 %v133, %v178
    %v254 = vmul.f32 %v134, %v178
    %v255 = vmul.f32 %v135, %v178
    %v256 = vmul.f32 %v136, %v183
    %v257 = vmul.f32 %v137, %v183
    %v258 = vmul.f32 %v138, %v183
    %v259 = vmul.f32 %v139, %v188
    %v260 = vmul.f32 %v140, %v188
    %v261 = vmul.f32 %v141, %v188
    %v262 = vmul.f32 %v142, %v173
    %v263 = vmul.f32 %v143, %v173
    %v264 = vmul.f32 %v144, %v173
    %v265 = vmul.f32 %v145, %v178
    %v266 = vmul.f32 %v146, %v178
    %v267 = vmul.f32 %v147, %v178
    %v268 = vmul.f32 %v148, %v183
    %v269 = vmul.f32 %v149, %v183
    %v270 = vmul.f32 %v150, %v183
    %v271 = vmul.f32 %v151, %v188
    %v272 = vmul.f32 %v152, %v188
    %v273 = vmul.f32 %v153, %v188
    %v274 = vmul.f32 %v154, %v173
    %v275 = vmul.f32 %v155, %v173
    %v276 = vmul.f32 %v156, %v173
    %v277 = vmul.f32 %v157, %v178
    %v278 = vmul.f32 %v158, %v178
    %v279 = vmul.f32 %v159, %v178
    %v280 = vmul.f32 %v160, %v183
    %v281 = vmul.f32 %v161, %v183
    %v282 = vmul.f32 %v162, %v183
    %v283 = vmul.f32 %v163, %v188
    %v284 = vmul.f32 %v164, %v188
    %v285 = vmul.f32 %v165, %v188
    %v286 = vadd.f32 %v190, %v193
    %v287 = vadd.f32 %v286, %v196
    %v288 = vadd.f32 %v287, %v199
    %v289 = vrot.slane %v288, 4
    %v290 = vadd.f32 %v288, %v289
    %v291 = vrot.slane %v290, 2
    %v292 = vadd.f32 %v290, %v291
    %v293 = vrot.slane %v292, 1
    %v294 = vadd.f32 %v292, %v293
    %v295 = vadd.f32 %v191, %v194
    %v296 = vadd.f32 %v295, %v197
    %v297 = vadd.f32 %v296, %v200
    %v298 = vrot.slane %v297, 4
    %v299 = vadd.f32 %v297, %v298
    %v300 = vrot.slane %v299, 2
    %v301 = vadd.f32 %v299, %v300
    %v302 = vrot.slane %v301, 1
    %v303 = vadd.f32 %v301, %v302
    %vm304 = vcmask 859136
    %v305 = vsel %vm304, %v192, 0.0
    %v306 = vsel %vm304, %v195, 0.0
    %v307 = vadd.f32 %v305, %v306
    %v308 = vsel %vm304, %v198, 0.0
    %v309 = vadd.f32 %v307, %v308
    %v310 = vsel %vm304, %v201, 0.0
    %v311 = vadd.f32 %v309, %v310
    %v312 = vrot.slane %v311, 4
    %v313 = vadd.f32 %v311, %v312
    %v314 = vrot.slane %v313, 2
    %v315 = vadd.f32 %v313, %v314
    %v316 = vrot.slane %v315, 1
    %v317 = vadd.f32 %v315, %v316
    %v318 = vadd.f32 %v202, %v205
    %v319 = vadd.f32 %v318, %v208
    %v320 = vadd.f32 %v319, %v211
    %v321 = vrot.slane %v320, 4
    %v322 = vadd.f32 %v320, %v321
    %v323 = vrot.slane %v322, 2
    %v324 = vadd.f32 %v322, %v323
    %v325 = vrot.slane %v324, 1
    %v326 = vadd.f32 %v324, %v325
    %v327 = vadd.f32 %v203, %v206
    %v328 = vadd.f32 %v327, %v209
    %v329 = vadd.f32 %v328, %v212
    %v330 = vrot.slane %v329, 4
    %v331 = vadd.f32 %v329, %v330
    %v332 = vrot.slane %v331, 2
    %v333 = vadd.f32 %v331, %v332
    %v334 = vrot.slane %v333, 1
    %v335 = vadd.f32 %v333, %v334
    %v336 = vsel %vm304, %v204, 0.0
    %v337 = vsel %vm304, %v207, 0.0
    %v338 = vadd.f32 %v336, %v337
    %v339 = vsel %vm304, %v210, 0.0
    %v340 = vadd.f32 %v338, %v339
    %v341 = vsel %vm304, %v213, 0.0
    %v342 = vadd.f32 %v340, %v341
    %v343 = vrot.slane %v342, 4
    %v344 = vadd.f32 %v342, %v343
    %v345 = vrot.slane %v344, 2
    %v346 = vadd.f32 %v344, %v345
    %v347 = vrot.slane %v346, 1
    %v348 = vadd.f32 %v346, %v347
    %v349 = vadd.f32 %v214, %v217
    %v350 = vadd.f32 %v349, %v220
    %v351 = vadd.f32 %v350, %v223
    %v352 = vrot.slane %v351, 4
    %v353 = vadd.f32 %v351, %v352
    %v354 = vrot.slane %v353, 2
    %v355 = vadd.f32 %v353, %v354
    %v356 = vrot.slane %v355, 1
    %v357 = vadd.f32 %v355, %v356
    %v358 = vadd.f32 %v215, %v218
    %v359 = vadd.f32 %v358, %v221
    %v360 = vadd.f32 %v359, %v224
    %v361 = vrot.slane %v360, 4
    %v362 = vadd.f32 %v360, %v361
    %v363 = vrot.slane %v362, 2
    %v364 = vadd.f32 %v362, %v363
    %v365 = vrot.slane %v364, 1
    %v366 = vadd.f32 %v364, %v365
    %v367 = vsel %vm304, %v216, 0.0
    %v368 = vsel %vm304, %v219, 0.0
    %v369 = vadd.f32 %v367, %v368
    %v370 = vsel %vm304, %v222, 0.0
    %v371 = vadd.f32 %v369, %v370
    %v372 = vsel %vm304, %v225, 0.0
    %v373 = vadd.f32 %v371, %v372
    %v374 = vrot.slane %v373, 4
    %v375 = vadd.f32 %v373, %v374
    %v376 = vrot.slane %v375, 2
    %v377 = vadd.f32 %v375, %v376
    %v378 = vrot.slane %v377, 1
    %v379 = vadd.f32 %v377, %v378
    %v380 = vadd.f32 %v226, %v229
    %v381 = vadd.f32 %v380, %v232
    %v382 = vadd.f32 %v381, %v235
    %v383 = vrot.slane %v382, 4
    %v384 = vadd.f32 %v382, %v383
    %v385 = vrot.slane %v384, 2
    %v386 = vadd.f32 %v384, %v385
    %v387 = vrot.slane %v386, 1
    %v388 = vadd.f32 %v386, %v387
    %v389 = vadd.f32 %v227, %v230
    %v390 = vadd.f32 %v389, %v233
    %v391 = vadd.f32 %v390, %v236
    %v392 = vrot.slane %v391, 4
    %v393 = vadd.f32 %v391, %v392
    %v394 = vrot.slane %v393, 2
    %v395 = vadd.f32 %v393, %v394
    %v396 = vrot.slane %v395, 1
    %v397 = vadd.f32 %v395, %v396
    %v398 = vsel %vm304, %v228, 0.0
    %v399 = vsel %vm304, %v231, 0.0
    %v400 = vadd.f32 %v398, %v399
    %v401 = vsel %vm304, %v234, 0.0
    %v402 = vadd.f32 %v400, %v401
    %v403 = vsel %vm304, %v237, 0.0
    %v404 = vadd.f32 %v402, %v403
    %v405 = vrot.slane %v404, 4
    %v406 = vadd.f32 %v404, %v405
    %v407 = vrot.slane %v406, 2
    %v408 = vadd.f32 %v406, %v407
    %v409 = vrot.slane %v408, 1
    %v410 = vadd.f32 %v408, %v409
    %v411 = vadd.f32 %v238, %v241
    %v412 = vadd.f32 %v411, %v244
    %v413 = vadd.f32 %v412, %v247
    %v414 = vrot.slane %v413, 4
    %v415 = vadd.f32 %v413, %v414
    %v416 = vrot.slane %v415, 2
    %v417 = vadd.f32 %v415, %v416
    %v418 = vrot.slane %v417, 1
    %v419 = vadd.f32 %v417, %v418
    %v420 = vadd.f32 %v239, %v242
    %v421 = vadd.f32 %v420, %v245
    %v422 = vadd.f32 %v421, %v248
    %v423 = vrot.slane %v422, 4
    %v424 = vadd.f32 %v422, %v423
    %v425 = vrot.slane %v424, 2
    %v426 = vadd.f32 %v424, %v425
    %v427 = vrot.slane %v426, 1
    %v428 = vadd.f32 %v426, %v427
    %v429 = vsel %vm304, %v240, 0.0
    %v430 = vsel %vm304, %v243, 0.0
    %v431 = vadd.f32 %v429, %v430
    %v432 = vsel %vm304, %v246, 0.0
    %v433 = vadd.f32 %v431, %v432
    %v434 = vsel %vm304, %v249, 0.0
    %v435 = vadd.f32 %v433, %v434
    %v436 = vrot.slane %v435, 4
    %v437 = vadd.f32 %v435, %v436
    %v438 = vrot.slane %v437, 2
    %v439 = vadd.f32 %v437, %v438
    %v440 = vrot.slane %v439, 1
    %v441 = vadd.f32 %v439, %v440
    %v442 = vadd.f32 %v250, %v253
    %v443 = vadd.f32 %v442, %v256
    %v444 = vadd.f32 %v443, %v259
    %v445 = vrot.slane %v444, 4
    %v446 = vadd.f32 %v444, %v445
    %v447 = vrot.slane %v446, 2
    %v448 = vadd.f32 %v446, %v447
    %v449 = vrot.slane %v448, 1
    %v450 = vadd.f32 %v448, %v449
    %v451 = vadd.f32 %v251, %v254
    %v452 = vadd.f32 %v451, %v257
    %v453 = vadd.f32 %v452, %v260
    %v454 = vrot.slane %v453, 4
    %v455 = vadd.f32 %v453, %v454
    %v456 = vrot.slane %v455, 2
    %v457 = vadd.f32 %v455, %v456
    %v458 = vrot.slane %v457, 1
    %v459 = vadd.f32 %v457, %v458
    %v460 = vsel %vm304, %v252, 0.0
    %v461 = vsel %vm304, %v255, 0.0
    %v462 = vadd.f32 %v460, %v461
    %v463 = vsel %vm304, %v258, 0.0
    %v464 = vadd.f32 %v462, %v463
    %v465 = vsel %vm304, %v261, 0.0
    %v466 = vadd.f32 %v464, %v465
    %v467 = vrot.slane %v466, 4
    %v468 = vadd.f32 %v466, %v467
    %v469 = vrot.slane %v468, 2
    %v470 = vadd.f32 %v468, %v469
    %v471 = vrot.slane %v470, 1
    %v472 = vadd.f32 %v470, %v471
    %v473 = vadd.f32 %v262, %v265
    %v474 = vadd.f32 %v473, %v268
    %v475 = vadd.f32 %v474, %v271
    %v476 = vrot.slane %v475, 4
    %v477 = vadd.f32 %v475, %v476
    %v478 = vrot.slane %v477, 2
    %v479 = vadd.f32 %v477, %v478
    %v480 = vrot.slane %v479, 1
    %v481 = vadd.f32 %v479, %v480
    %v482 = vadd.f32 %v263, %v266
    %v483 = vadd.f32 %v482, %v269
    %v484 = vadd.f32 %v483, %v272
    %v485 = vrot.slane %v484, 4
    %v486 = vadd.f32 %v484, %v485
    %v487 = vrot.slane %v486, 2
    %v488 = vadd.f32 %v486, %v487
    %v489 = vrot.slane %v488, 1
    %v490 = vadd.f32 %v488, %v489
    %v491 = vsel %vm304, %v264, 0.0
    %v492 = vsel %vm304, %v267, 0.0
    %v493 = vadd.f32 %v491, %v492
    %v494 = vsel %vm304, %v270, 0.0
    %v495 = vadd.f32 %v493, %v494
    %v496 = vsel %vm304, %v273, 0.0
    %v497 = vadd.f32 %v495, %v496
    %v498 = vrot.slane %v497, 4
    %v499 = vadd.f32 %v497, %v498
    %v500 = vrot.slane %v499, 2
    %v501 = vadd.f32 %v499, %v500
    %v502 = vrot.slane %v501, 1
    %v503 = vadd.f32 %v501, %v502
    %v504 = vadd.f32 %v274, %v277
    %v505 = vadd.f32 %v504, %v280
    %v506 = vadd.f32 %v505, %v283
    %v507 = vrot.slane %v506, 4
    %v508 = vadd.f32 %v506, %v507
    %v509 = vrot.slane %v508, 2
    %v510 = vadd.f32 %v508, %v509
    %v511 = vrot.slane %v510, 1
    %v512 = vadd.f32 %v510, %v511
    %v513 = vadd.f32 %v275, %v278
    %v514 = vadd.f32 %v513, %v281
    %v515 = vadd.f32 %v514, %v284
    %v516 = vrot.slane %v515, 4
    %v517 = vadd.f32 %v515, %v516
    %v518 = vrot.slane %v517, 2
    %v519 = vadd.f32 %v517, %v518
    %v520 = vrot.slane %v519, 1
    %v521 = vadd.f32 %v519, %v520
    %v522 = vsel %vm304, %v276, 0.0
    %v523 = vsel %vm304, %v279, 0.0
    %v524 = vadd.f32 %v522, %v523
    %v525 = vsel %vm304, %v282, 0.0
    %v526 = vadd.f32 %v524, %v525
    %v527 = vsel %vm304, %v285, 0.0
    %v528 = vadd.f32 %v526, %v527
    %v529 = vrot.slane %v528, 4
    %v530 = vadd.f32 %v528, %v529
    %v531 = vrot.slane %v530, 2
    %v532 = vadd.f32 %v530, %v531
    %v533 = vrot.slane %v532, 1
    %v534 = vadd.f32 %v532, %v533
    %v535 = vstv %s68
    %v536 = vadd.f32 %v294, %v535
    %v537 = vadd.f32 %v303, %v535
    %v538 = vadd.f32 %v317, %v535
    %v539 = vadd.f32 %v326, %v535
    %v540 = vadd.f32 %v335, %v535
    %v541 = vadd.f32 %v348, %v535
    %v542 = vadd.f32 %v357, %v535
    %v543 = vadd.f32 %v366, %v535
    %v544 = vadd.f32 %v379, %v535
    %v545 = vadd.f32 %v388, %v535
    %v546 = vadd.f32 %v397, %v535
    %v547 = vadd.f32 %v410, %v535
    %v548 = vadd.f32 %v419, %v535
    %v549 = vadd.f32 %v428, %v535
    %v550 = vadd.f32 %v441, %v535
    %v551 = vadd.f32 %v450, %v535
    %v552 = vadd.f32 %v459, %v535
    %v553 = vadd.f32 %v472, %v535
    %v554 = vadd.f32 %v481, %v535
    %v555 = vadd.f32 %v490, %v535
    %v556 = vadd.f32 %v503, %v535
    %v557 = vadd.f32 %v512, %v535
    %v558 = vadd.f32 %v521, %v535
    %v559 = vadd.f32 %v534, %v535
    %v560 = vmax.f32 %v536, 0.0
    %v561 = vmax.f32 %v537, 0.0
    %v562 = vmax.f32 %v538, 0.0
    %v563 = vmax.f32 %v539, 0.0
    %v564 = vmax.f32 %v540, 0.0
    %v565 = vmax.f32 %v541, 0.0
    %v566 = vmax.f32 %v542, 0.0
    %v567 = vmax.f32 %v543, 0.0
    %v568 = vmax.f32 %v544, 0.0
    %v569 = vmax.f32 %v545, 0.0
    %v570 = vmax.f32 %v546, 0.0
    %v571 = vmax.f32 %v547, 0.0
    %v572 = vmax.f32 %v548, 0.0
    %v573 = vmax.f32 %v549, 0.0
    %v574 = vmax.f32 %v550, 0.0
    %v575 = vmax.f32 %v551, 0.0
    %v576 = vmax.f32 %v552, 0.0
    %v577 = vmax.f32 %v553, 0.0
    %v578 = vmax.f32 %v554, 0.0
    %v579 = vmax.f32 %v555, 0.0
    %v580 = vmax.f32 %v556, 0.0
    %v581 = vmax.f32 %v557, 0.0
    %v582 = vmax.f32 %v558, 0.0
    %v583 = vmax.f32 %v559, 0.0
    %v584 = vld [vmem:[#allocation5] sm:$0xff]
    %v585 = vld [vmem:[#allocation5 + $0x8] sm:$0xff]
    %v586 = vld [vmem:[#allocation5 + $0x10] sm:$0xff]
    %v587 = vld [vmem:[#allocation5 + $0x18] sm:$0xff]
    %v588 = vld [vmem:[#allocation5 + $0x20] sm:$0xff]
    %v589 = vld [vmem:[#allocation5 + $0x28] sm:$0xff]
    %v590 = vld [vmem:[#allocation5 + $0x30] sm:$0xff]
    %v591 = vld [vmem:[#allocation5 + $0x38] sm:$0xff]
    %v592 = vld [vmem:[#allocation5 + $0x40] sm:$0xff]
    %v593 = vld [vmem:[#allocation5 + $0x48] sm:$0xff]
    %v594 = vld [vmem:[#allocation5 + $0x50] sm:$0xff]
    %v595 = vld [vmem:[#allocation5 + $0x58] sm:$0xff]
    %v596 = vld [vmem:[#allocation5 + $0x60] sm:$0xff]
    %v597 = vld [vmem:[#allocation5 + $0x68] sm:$0xff]
    %v598 = vld [vmem:[#allocation5 + $0x70] sm:$0xff]
    %v599 = vld [vmem:[#allocation5 + $0x78] sm:$0xff]
    %v600 = vld [vmem:[#allocation5 + $0x80] sm:$0xff]
    %v601 = vld [vmem:[#allocation5 + $0x88] sm:$0xff]
    %v602 = vld [vmem:[#allocation5 + $0x90] sm:$0xff]
    %v603 = vld [vmem:[#allocation5 + $0x98] sm:$0xff]
    %v604 = vld [vmem:[#allocation5 + $0xa0] sm:$0xff]
    %v605 = vld [vmem:[#allocation5 + $0xa8] sm:$0xff]
    %v606 = vld [vmem:[#allocation5 + $0xb0] sm:$0xff]
    %v607 = vld [vmem:[#allocation5 + $0xb8] sm:$0xff]
    %v608 = vld [vmem:[#allocation5 + $0xc0] sm:$0xff]
    %v609 = vld [vmem:[#allocation5 + $0xc8] sm:$0xff]
    %v610 = vld [vmem:[#allocation5 + $0xd0] sm:$0xff]
    %v611 = vld [vmem:[#allocation5 + $0xd8] sm:$0xff]
    %v612 = vld [vmem:[#allocation5 + $0xe0] sm:$0xff]
    %v613 = vld [vmem:[#allocation5 + $0xe8] sm:$0xff]
    %v614 = vld [vmem:[#allocation5 + $0xf0] sm:$0xff]
    %v615 = vld [vmem:[#allocation5 + $0xf8] sm:$0xff]
    %v616 = vld [vmem:[#allocation5 + $0x100] sm:$0xff]
    %v617 = vld [vmem:[#allocation5 + $0x108] sm:$0xff]
    %v618 = vld [vmem:[#allocation5 + $0x110] sm:$0xff]
    %v619 = vld [vmem:[#allocation5 + $0x118] sm:$0xff]
    %v620 = vld [vmem:[#allocation5 + $0x120] sm:$0xff]
    %v621 = vld [vmem:[#allocation5 + $0x128] sm:$0xff]
    %v622 = vld [vmem:[#allocation5 + $0x130] sm:$0xff]
    %v623 = vld [vmem:[#allocation5 + $0x138] sm:$0xff]
    %v624 = vld [vmem:[#allocation5 + $0x140] sm:$0xff]
    %v625 = vld [vmem:[#allocation5 + $0x148] sm:$0xff]
    %v626 = vld [vmem:[#allocation5 + $0x150] sm:$0xff]
    %v627 = vld [vmem:[#allocation5 + $0x158] sm:$0xff]
    %v628 = vld [vmem:[#allocation5 + $0x160] sm:$0xff]
    %v629 = vld [vmem:[#allocation5 + $0x168] sm:$0x1]
    %v630 = vld [vmem:[%s3] sm:$0x1]
    %v632 = vperm.slane %v630, 0
    %vm658 = vcmask 1041409
    %v659 = vsel %vm658, %v563, %v560
    %vm660 = vcmask 1042434
    %v661 = vsel %vm660, %v566, %v659
    %vm662 = vcmask 1043459
    %v663 = vsel %vm662, %v569, %v661
    %vm664 = vcmask 1044484
    %v665 = vsel %vm664, %v572, %v663
    %vm666 = vcmask 1045509
    %v667 = vsel %vm666, %v575, %v665
    %vm668 = vcmask 1046534
    %v669 = vsel %vm668, %v578, %v667
    %vm670 = vcmask 1047559
    %v671 = vsel %vm670, %v581, %v669
    %v672 = vsel %vm658, %v564, %v561
    %v673 = vsel %vm660, %v567, %v672
    %v674 = vsel %vm662, %v570, %v673
    %v675 = vsel %vm664, %v573, %v674
    %v676 = vsel %vm666, %v576, %v675
    %v677 = vsel %vm668, %v579, %v676
    %v678 = vsel %vm670, %v582, %v677
    %v679 = vsel %vm658, %v565, %v562
    %v680 = vsel %vm660, %v568, %v679
    %v681 = vsel %vm662, %v571, %v680
    %v682 = vsel %vm664, %v574, %v681
    %v683 = vsel %vm666, %v577, %v682
    %v684 = vsel %vm668, %v580, %v683
    %v685 = vsel %vm670, %v583, %v684
    %v688 = vsel %vm304, %v685, 0
    %vm690 = vcmask 1040384
    %v692 = vsel %vm690, %v629, 0
    %694 = vmatpush.msra.mxu0 %v599
    %695 = vmatpush.msra.mxu0 %v598
    %696 = vmatpush.msra.mxu0 %v597
    %697 = vmatpush.msra.mxu0 %v596
    %698 = vmatpush.msra.mxu0 %v595
    %699 = vmatpush.msra.mxu0 %v594
    %700 = vmatpush.msra.mxu0 %v593
    %701 = vmatpush.msra.mxu0 %v592
    %702 = vmatpush.msra.mxu0 %v591
    %703 = vmatpush.msra.mxu0 %v590
    %704 = vmatpush.msra.mxu0 %v589
    %705 = vmatpush.msra.mxu0 %v588
    %706 = vmatpush.msra.mxu0 %v587
    %707 = vmatpush.msra.mxu0 %v586
    %708 = vmatpush.msra.mxu0 %v585
    %709 = vmatpush.msra.mxu0 %v584
    %710 = vmatmul.f32.gmra.mxu0 %v671
    %v711 = vpop.f32.mrf.mxu0
    %v712 = vadd.f32 %v632, %v711
    %713 = vdwg.mxu0
    %714 = vmatpush.msra.mxu0 %v615
    %715 = vmatpush.msra.mxu0 %v614
    %716 = vmatpush.msra.mxu0 %v613
    %717 = vmatpush.msra.mxu0 %v612
    %718 = vmatpush.msra.mxu0 %v611
    %719 = vmatpush.msra.mxu0 %v610
    %720 = vmatpush.msra.mxu0 %v609
    %721 = vmatpush.msra.mxu0 %v608
    %722 = vmatpush.msra.mxu0 %v607
    %723 = vmatpush.msra.mxu0 %v606
    %724 = vmatpush.msra.mxu0 %v605
    %725 = vmatpush.msra.mxu0 %v604
    %726 = vmatpush.msra.mxu0 %v603
    %727 = vmatpush.msra.mxu0 %v602
    %728 = vmatpush.msra.mxu0 %v601
    %729 = vmatpush.msra.mxu0 %v600
    %730 = vmatmul.f32.gmra.mxu0 %v678
    %v731 = vpop.f32.mrf.mxu0
    %v732 = vadd.f32 %v712, %v731
    %733 = vdwg.mxu0
    %734 = vmatpush.msra.mxu0 0.0
    %735 = vmatpush.msra.mxu0 0.0
    %736 = vmatpush.msra.mxu0 %v692
    %737 = vmatpush.msra.mxu0 %v628
    %738 = vmatpush.msra.mxu0 %v627
    %739 = vmatpush.msra.mxu0 %v626
    %740 = vmatpush.msra.mxu0 %v625
    %741 = vmatpush.msra.mxu0 %v624
    %742 = vmatpush.msra.mxu0 %v623
    %743 = vmatpush.msra.mxu0 %v622
    %744 = vmatpush.msra.mxu0 %v621
    %745 = vmatpush.msra.mxu0 %v620
    %746 = vmatpush.msra.mxu0 %v619
    %747 = vmatpush.msra.mxu0 %v618
    %748 = vmatpush.msra.mxu0 %v617
    %749 = vmatpush.msra.mxu0 %v616
    %750 = vmatmul.f32.gmra.mxu0 %v688
    %v751 = vpop.f32.mrf.mxu0
    %v752 = vadd.f32 %v732, %v751
    %753 = vdwg.mxu0
    %v754 = vmax.f32 %v752, 0.0
    %v755 = vld [vmem:[%s4] sm:$0x1]
    %v757 = vperm.slane %v755, 0
    %v759 = vmul.f32 %v754, %v757
    %760 = vadd.xlane.f32.xlu0 %v759
    %v761 = vpop.xlane.xlu0 %760
    %v762 = vstv %s69
    %v763 = vadd.f32 %v761, %v762
    %vm764 = vcmask 7168
    %765 = vst.msk [vmem:[%s6] sm:$0xff] %vm764, %v763
    // Predicated region
    $region38: #{tpu_custom_call.1} parent=1 // pred_check
      _
    $region39: #{tpu_custom_call.1} parent=1 // pred_check_branch
      %767 = sbr.rel (0) target = $region41
    $region40: #{tpu_custom_call.1} parent=1 // pred_region
      _
    $region41: #{tpu_custom_call.1} parent=1 // pred_fallthru
      _
    // Predicated region
    $region42: #{tpu_custom_call.1} parent=1 // pred_check
      _
    $region43: #{tpu_custom_call.1} parent=1 // pred_check_branch
      %769 = sbr.rel (0) target = $region45
    $region44: #{tpu_custom_call.1} parent=1 // pred_region
      _
    $region45: #{tpu_custom_call.1} parent=1 // pred_fallthru
      _
    %770 = vsyncpa [#allocation3], 1
    %771 = vsyncpa [#allocation6], 1
    %772 = vsyncpa [#allocation4], 1

</llo_original>
